<compile_context>
chip_gen: v6e
topology: v6e:2x2x1
jax: 0.10.0
libtpu: 0.0.40
codegen_flags: <defaults>
</compile_context>

<pallas_src>
import functools
import math

import jax
import jax.numpy as jnp
from jax import lax
from jax.experimental import pallas as pl
from jax.experimental.pallas import tpu as pltpu


def _round_up(x, m):
    return ((x + m - 1) // m) * m


def _largest_divisor_tile(n, cap, step):
    """Largest multiple of `step` that divides n and is <= cap (n % step == 0)."""
    t = min(n, (cap // step) * step)
    while n % t:
        t -= step
    return t


# ---------------------------------------------------------------------------
# Stage 1: fused QKV projection   q,k,v = split(x @ W_qkv + b_qkv)
#   x:     (tm, Dp)    bf16   (batch folded into rows)
#   W_qkv: (Dp, 3*Dp)  bf16   (resident; q | k | v; 1/sqrt(D) folded into q cols)
#   b_qkv: (1, 3*Dp)   f32
# ---------------------------------------------------------------------------
def _qkv_fused_kernel(x_ref, w_ref, b_ref, q_ref, k_ref, v_ref):
    acc = jnp.dot(x_ref[...], w_ref[...], preferred_element_type=jnp.float32)
    acc = acc + b_ref[...]
    dp = q_ref.shape[-1]                       # multiple of 128 -> lane-aligned slices
    q_ref[...] = acc[:, 0 * dp:1 * dp].astype(q_ref.dtype)
    k_ref[...] = acc[:, 1 * dp:2 * dp].astype(k_ref.dtype)
    v_ref[...] = acc[:, 2 * dp:3 * dp].astype(v_ref.dtype)


def _proj_kernel(x_ref, w_ref, b_ref, o_ref):
    acc = jnp.dot(x_ref[...], w_ref[...], preferred_element_type=jnp.float32)
    o_ref[...] = (acc + b_ref[...]).astype(o_ref.dtype)


# ---------------------------------------------------------------------------
# Stage 2: flash attention with online softmax.
#   grid = (B, num_q_tiles, num_kv_tiles); kv is the last ("arbitrary") axis.
# ---------------------------------------------------------------------------
def _flash_attn_kernel(q_ref, k_ref, v_ref, o_ref, m_ref, l_ref, acc_ref,
                       *, seq_len, kv_tile, mask_kv, mask_value):
    ki = pl.program_id(2)

    @pl.when(ki == 0)
    def _():
        m_ref[...] = jnp.full(m_ref.shape, mask_value, dtype=m_ref.dtype)
        l_ref[...] = jnp.zeros(l_ref.shape, dtype=l_ref.dtype)
        acc_ref[...] = jnp.zeros(acc_ref.shape, dtype=acc_ref.dtype)

    q = q_ref[0]                 # (tq, Dp) bf16 -- 1/sqrt(D) already folded in
    k = k_ref[0]                 # (tkv, Dp) bf16
    # Contract the feature dim directly (no k.T -> no XLU transpose / extra buffer).
    s = lax.dot_general(q, k, dimension_numbers=(((1,), (1,)), ((), ())),
                        preferred_element_type=jnp.float32)        # (tq, tkv)

    if mask_kv:  # only traced when the sequence was padded
        kv_pos = ki * kv_tile + lax.broadcasted_iota(jnp.int32, s.shape, 1)
        s = jnp.where(kv_pos < seq_len, s, mask_value)

    m_prev = m_ref[...]
    m_new = jnp.maximum(m_prev, jnp.max(s, axis=-1, keepdims=True))
    alpha = jnp.exp(m_prev - m_new)
    p = jnp.exp(s - m_new)
    l_ref[...] = alpha * l_ref[...] + jnp.sum(p, axis=-1, keepdims=True)
    acc_ref[...] = alpha * acc_ref[...] + jnp.dot(
        p.astype(v_ref.dtype), v_ref[0], preferred_element_type=jnp.float32)
    m_ref[...] = m_new

    @pl.when(ki == pl.num_programs(2) - 1)
    def _():
        # Exact reciprocal: runs once per q tile, negligible cost, tighter accuracy.
        o_ref[0] = (acc_ref[...] * (1.0 / l_ref[...])).astype(o_ref.dtype)


def attention_pallas(x, wq, bq, wk, bk, wv, bv):
    """x: (B, S, D); w*: PyTorch-style (D_out, D_in); b*: (D,)."""
    B, S, D = x.shape
    out_dtype = x.dtype

    # ---- generation-aware VMEM budget -------------------------------------
    try:
        vmem_cap = int(pltpu.get_tpu_info().vmem_capacity_bytes)
    except Exception:
        vmem_cap = 128 * 1024 * 1024
    vmem_limit = min(48 * 1024 * 1024, vmem_cap // 2)

    # ---- tiling / padding decisions ----------------------------------------
    Dp = _round_up(D, 128)                 # lane-dense feature dim
    # TODO(synk): for production D < 128, 1 - D/Dp of the HBM/MXU work is zero
    # padding; folding heads/batch into the lane dim would recover it.

    if S <= 256:
        Sp = _round_up(S, 16)              # multiples of 16: dense bf16 sublane packing
        tq = Sp
        tkv = Sp
    else:
        Sp = _round_up(S, 256)
        tkv = 256
        tq = _largest_divisor_tile(Sp, cap=512, step=16)

    # KV-resident mode: if one batch's padded K+V (bf16, double-buffered) fits the
    # budget, use the whole sequence as the kv block -> K/V DMA'd once per batch.
    kv_bytes = 2 * Sp * Dp * 2
    if 2 * kv_bytes <= vmem_limit // 2:
        tkv = Sp

    # Keep >= 2 parallel grid steps where possible (v7x has 2 TensorCores/chip).
    if B * (Sp // tq) < 2 and tq % 32 == 0:
        tq //= 2

    n_q = Sp // tq
    n_kv = Sp // tkv
    M = B * Sp                             # projection rows (batch folded in)
    tm = _largest_divisor_tile(M, cap=512, step=16)
    if (M // tm) < 2 and tm % 32 == 0:
        tm //= 2

    # ---- parameter prep: bf16 MXU operands, f32 bias, scale folded into q ----
    scale = 1.0 / math.sqrt(D)             # matches np.sqrt(x.size(-1))
    w_qkv = jnp.zeros((Dp, 3 * Dp), jnp.float32)
    w_qkv = w_qkv.at[:D, 0 * Dp:0 * Dp + D].set(wq.T * scale)
    w_qkv = w_qkv.at[:D, 1 * Dp:1 * Dp + D].set(wk.T)
    w_qkv = w_qkv.at[:D, 2 * Dp:2 * Dp + D].set(wv.T)
    w_qkv = w_qkv.astype(jnp.bfloat16)
    b_qkv = jnp.zeros((1, 3 * Dp), jnp.float32)
    b_qkv = b_qkv.at[0, 0 * Dp:0 * Dp + D].set(bq * scale)
    b_qkv = b_qkv.at[0, 1 * Dp:1 * Dp + D].set(bk)
    b_qkv = b_qkv.at[0, 2 * Dp:2 * Dp + D].set(bv)

    x_p = jnp.pad(x, ((0, 0), (0, Sp - S), (0, Dp - D))).astype(jnp.bfloat16)
    x2d = x_p.reshape(M, Dp)

    # ---- stage 1: fused QKV projection (weight-resident) -------------------
    w_bytes = 3 * Dp * Dp * 2
    proj_params = pltpu.CompilerParams(
        dimension_semantics=("parallel",), vmem_limit_bytes=vmem_limit)

    if 2 * w_bytes <= vmem_limit // 4:
        q2d, k2d, v2d = pl.pallas_call(
            _qkv_fused_kernel,
            out_shape=(jax.ShapeDtypeStruct((M, Dp), jnp.bfloat16),
                       jax.ShapeDtypeStruct((M, Dp), jnp.bfloat16),
                       jax.ShapeDtypeStruct((M, Dp), jnp.bfloat16)),
            grid_spec=pltpu.PrefetchScalarGridSpec(
                num_scalar_prefetch=0,
                grid=(M // tm,),
                in_specs=[
                    pl.BlockSpec((tm, Dp), lambda i: (i, 0)),          # x rows stream
                    pl.BlockSpec((Dp, 3 * Dp), lambda i: (0, 0)),      # W resident
                    pl.BlockSpec((1, 3 * Dp), lambda i: (0, 0)),       # bias resident
                ],
                out_specs=[
                    pl.BlockSpec((tm, Dp), lambda i: (i, 0)),
                    pl.BlockSpec((tm, Dp), lambda i: (i, 0)),
                    pl.BlockSpec((tm, Dp), lambda i: (i, 0)),
                ],
            ),
            compiler_params=proj_params,
        )(x2d, w_qkv, b_qkv)
    else:
        # Fallback for very large D: three separate weight-resident projections.
        # TODO(synk): column-tile the weight if even a single (Dp, Dp) block exceeds VMEM.
        def _one(col):
            return pl.pallas_call(
                _proj_kernel,
                out_shape=jax.ShapeDtypeStruct((M, Dp), jnp.bfloat16),
                grid_spec=pltpu.PrefetchScalarGridSpec(
                    num_scalar_prefetch=0,
                    grid=(M // tm,),
                    in_specs=[
                        pl.BlockSpec((tm, Dp), lambda i: (i, 0)),
                        pl.BlockSpec((Dp, Dp), lambda i: (0, 0)),
                        pl.BlockSpec((1, Dp), lambda i: (0, 0)),
                    ],
                    out_specs=pl.BlockSpec((tm, Dp), lambda i: (i, 0)),
                ),
                compiler_params=proj_params,
            )(x2d, w_qkv[:, col * Dp:(col + 1) * Dp],
              b_qkv[:, col * Dp:(col + 1) * Dp])
        q2d, k2d, v2d = _one(0), _one(1), _one(2)

    q3 = q2d.reshape(B, Sp, Dp)    # three contiguous (B, Sp, Dp) tensors
    k3 = k2d.reshape(B, Sp, Dp)
    v3 = v2d.reshape(B, Sp, Dp)

    # ---- stage 2: flash attention -------------------------------------------
    mask_value = float(jnp.finfo(jnp.float32).min) / 2.0   # finite: no -inf NaN footgun
    kernel = functools.partial(_flash_attn_kernel, seq_len=S, kv_tile=tkv,
                               mask_kv=(Sp > S), mask_value=mask_value)
    out_p = pl.pallas_call(
        kernel,
        out_shape=jax.ShapeDtypeStruct((B, Sp, Dp), out_dtype),
        grid_spec=pltpu.PrefetchScalarGridSpec(
            num_scalar_prefetch=0,
            grid=(B, n_q, n_kv),
            in_specs=[
                pl.BlockSpec((1, tq, Dp), lambda b, qi, ki: (b, qi, 0)),   # q
                pl.BlockSpec((1, tkv, Dp), lambda b, qi, ki: (b, ki, 0)),  # k (contig)
                pl.BlockSpec((1, tkv, Dp), lambda b, qi, ki: (b, ki, 0)),  # v (contig)
            ],
            out_specs=pl.BlockSpec((1, tq, Dp), lambda b, qi, ki: (b, qi, 0)),
            scratch_shapes=[
                pltpu.VMEM((tq, 1), jnp.float32),    # running max  m
                pltpu.VMEM((tq, 1), jnp.float32),    # running sum  l
                pltpu.VMEM((tq, Dp), jnp.float32),   # output accumulator
            ],
        ),
        compiler_params=pltpu.CompilerParams(
            dimension_semantics=("parallel", "parallel", "arbitrary"),
            vmem_limit_bytes=vmem_limit,
        ),
    )(q3, k3, v3)

    return out_p[:, :S, :D]


def attention_ref(x, wq, bq, wk, bk, wv, bv):
    """Pure-JAX f32 reference mirroring the PyTorch forward."""
    q = x @ wq.T + bq
    k = x @ wk.T + bk
    v = x @ wv.T + bv
    s = jnp.einsum("bqd,bkd->bqk", q, k) / jnp.sqrt(jnp.float32(x.shape[-1]))
    w = jax.nn.softmax(s, axis=-1)
    return jnp.einsum("bqk,bkd->bqd", w, v)


if __name__ == "__main__":
    B, S, D = 2, 8, 32  # batch, seq, in_dim

    key = jax.random.PRNGKey(0)
    kx, kq, kbq, kk, kbk, kv, kbv = jax.random.split(key, 7)

    bound = 1.0 / math.sqrt(D)
    x = jax.random.normal(kx, (B, S, D), dtype=jnp.float32)
    wq = jax.random.uniform(kq, (D, D), jnp.float32, -bound, bound)
    bq = jax.random.uniform(kbq, (D,), jnp.float32, -bound, bound)
    wk = jax.random.uniform(kk, (D, D), jnp.float32, -bound, bound)
    bk = jax.random.uniform(kbk, (D,), jnp.float32, -bound, bound)
    wv = jax.random.uniform(kv, (D, D), jnp.float32, -bound, bound)
    bv = jax.random.uniform(kbv, (D,), jnp.float32, -bound, bound)

    out = attention_pallas(x, wq, bq, wk, bk, wv, bv)
    jax.block_until_ready(out)

    ref = attention_ref(x, wq, bq, wk, bk, wv, bv)
    assert out.shape == (B, S, D)
    # bf16 MXU operands -> loosened tolerance.
    assert jnp.allclose(out, ref, atol=2e-2, rtol=2e-2), "Pallas output mismatch vs reference"

    print("KERNEL_OK")
</pallas_src>

<mosaic_0001>
module attributes {stable_mosaic.version = 11 : i64} {
  func.func @_qkv_fused_kernel(%arg0: i32, %arg1: memref<16x128xbf16, #tpu.memory_space<vmem>>, %arg2: memref<128x384xbf16, #tpu.memory_space<vmem>>, %arg3: memref<1x384xf32, #tpu.memory_space<vmem>>, %arg4: memref<16x128xbf16, #tpu.memory_space<vmem>>, %arg5: memref<16x128xbf16, #tpu.memory_space<vmem>>, %arg6: memref<16x128xbf16, #tpu.memory_space<vmem>>) attributes {dimension_semantics = [#tpu.dimension_semantics<parallel>], iteration_bounds = array<i64: 2>, scalar_prefetch = 0 : i64, scratch_operands = 0 : i64, tpu.core_type = #tpu.core_type<tc>, window_params = [{transform_indices = @transform_0, window_bounds = array<i64: 16, 128>}, {pipeline_mode = #tpu.pipeline_mode<synchronous>, transform_indices = @transform_1, window_bounds = array<i64: 128, 384>}, {pipeline_mode = #tpu.pipeline_mode<synchronous>, transform_indices = @transform_2, window_bounds = array<i64: 1, 384>}, {transform_indices = @transform_3, window_bounds = array<i64: 16, 128>}, {transform_indices = @transform_4, window_bounds = array<i64: 16, 128>}, {transform_indices = @transform_5, window_bounds = array<i64: 16, 128>}]} {
    %c0 = arith.constant 0 : index
    %c0_0 = arith.constant 0 : index
    %0 = vector.load %arg1[%c0, %c0_0] : memref<16x128xbf16, #tpu.memory_space<vmem>>, vector<16x128xbf16>
    %c0_1 = arith.constant 0 : index
    %c0_2 = arith.constant 0 : index
    %1 = vector.load %arg2[%c0_1, %c0_2] : memref<128x384xbf16, #tpu.memory_space<vmem>>, vector<128x384xbf16>
    %cst = arith.constant dense<0.000000e+00> : vector<16x384xf32>
    %2 = tpu.matmul %0, %1, %cst {dimension_numbers = #tpu.dot_dimension_numbers<[1], [0], [0], [1], [0, 0, 1, 1], [], []>} : vector<16x128xbf16>, vector<128x384xbf16>, vector<16x384xf32> -> vector<16x384xf32>
    %c0_3 = arith.constant 0 : index
    %c0_4 = arith.constant 0 : index
    %3 = vector.load %arg3[%c0_3, %c0_4] : memref<1x384xf32, #tpu.memory_space<vmem>>, vector<1x384xf32>
    %4 = vector.broadcast %3 : vector<1x384xf32> to vector<16x384xf32>
    %5 = arith.addf %2, %4 : vector<16x384xf32>
    %6 = vector.extract_strided_slice %5 {offsets = [0, 0], sizes = [16, 128], strides = [1, 1]} : vector<16x384xf32> to vector<16x128xf32>
    %7 = arith.truncf %6 : vector<16x128xf32> to vector<16x128xbf16>
    %c0_5 = arith.constant 0 : index
    %c0_6 = arith.constant 0 : index
    %8 = vector.load %arg4[%c0_5, %c0_6] : memref<16x128xbf16, #tpu.memory_space<vmem>>, vector<16x128xbf16>
    tpu.vector_store %arg4[%c0_5, %c0_6], %7 {strides = array<i32>} : memref<16x128xbf16, #tpu.memory_space<vmem>>, vector<16x128xbf16>,
    %9 = vector.extract_strided_slice %5 {offsets = [0, 128], sizes = [16, 128], strides = [1, 1]} : vector<16x384xf32> to vector<16x128xf32>
    %10 = arith.truncf %9 : vector<16x128xf32> to vector<16x128xbf16>
    %c0_7 = arith.constant 0 : index
    %c0_8 = arith.constant 0 : index
    %11 = vector.load %arg5[%c0_7, %c0_8] : memref<16x128xbf16, #tpu.memory_space<vmem>>, vector<16x128xbf16>
    tpu.vector_store %arg5[%c0_7, %c0_8], %10 {strides = array<i32>} : memref<16x128xbf16, #tpu.memory_space<vmem>>, vector<16x128xbf16>,
    %12 = vector.extract_strided_slice %5 {offsets = [0, 256], sizes = [16, 128], strides = [1, 1]} : vector<16x384xf32> to vector<16x128xf32>
    %13 = arith.truncf %12 : vector<16x128xf32> to vector<16x128xbf16>
    %c0_9 = arith.constant 0 : index
    %c0_10 = arith.constant 0 : index
    %14 = vector.load %arg6[%c0_9, %c0_10] : memref<16x128xbf16, #tpu.memory_space<vmem>>, vector<16x128xbf16>
    tpu.vector_store %arg6[%c0_9, %c0_10], %13 {strides = array<i32>} : memref<16x128xbf16, #tpu.memory_space<vmem>>, vector<16x128xbf16>,
    return
  }
  func.func @transform_0(%arg0: i32) -> (i32, i32) {
    %c0_i32 = arith.constant 0 : i32
    %c0_i32_0 = arith.constant 0 : i32
    return %arg0, %c0_i32 : i32, i32
  }
  func.func @transform_1(%arg0: i32) -> (i32, i32) {
    %c0_i32 = arith.constant 0 : i32
    %c0_i32_0 = arith.constant 0 : i32
    %c0_i32_1 = arith.constant 0 : i32
    return %c0_i32, %c0_i32_0 : i32, i32
  }
  func.func @transform_2(%arg0: i32) -> (i32, i32) {
    %c0_i32 = arith.constant 0 : i32
    %c0_i32_0 = arith.constant 0 : i32
    %c0_i32_1 = arith.constant 0 : i32
    return %c0_i32, %c0_i32_0 : i32, i32
  }
  func.func @transform_3(%arg0: i32) -> (i32, i32) {
    %c0_i32 = arith.constant 0 : i32
    %c0_i32_0 = arith.constant 0 : i32
    return %arg0, %c0_i32 : i32, i32
  }
  func.func @transform_4(%arg0: i32) -> (i32, i32) {
    %c0_i32 = arith.constant 0 : i32
    %c0_i32_0 = arith.constant 0 : i32
    return %arg0, %c0_i32 : i32, i32
  }
  func.func @transform_5(%arg0: i32) -> (i32, i32) {
    %c0_i32 = arith.constant 0 : i32
    %c0_i32_0 = arith.constant 0 : i32
    return %arg0, %c0_i32 : i32, i32
  }
}

</mosaic_0001>

<llo_original>
// kernel: tpu_custom_call.1
$region0: #{tpu_custom_call.1}
  #allocation0 [shape = 'u32[]', space=smem, size = 0x4, offset = 0x4, fixed_abs, tag = 'smem constant byte address 0x4 - core index']
  #allocation1 [shape = 'u32[144,128]{1,0:T(1,128)}', space=vmem, size = 0x12000, scoped, tag = 'internal scratch']
  %s0 = inlined_call_operand.hbm [shape: bf16[32,128], index: 0, kind: input, shape index: {}]
  %s1 = inlined_call_operand.hbm [shape: bf16[128,384], index: 1, kind: input, shape index: {}]
  %s2 = inlined_call_operand.vmem [shape: f32[1,384], index: 2, kind: input, shape index: {}]
  %s3 = inlined_call_operand.hbm [shape: bf16[32,128], index: 3, kind: output, shape index: {0}]
  %s4 = inlined_call_operand.hbm [shape: bf16[32,128], index: 4, kind: output, shape index: {1}]
  %s5 = inlined_call_operand.hbm [shape: bf16[32,128], index: 5, kind: output, shape index: {2}]
  %6 = xla_tuple %s3, %s4, %s5
  %s7 = sld [smem:[#allocation0]]
  $region69: #{tpu_custom_call.1} parent=0
    _
  %s9 = ssub.s32 1, %s7
  %s10 = scalar_select 0, %s9, %s7
  $region1: #{tpu_custom_call.1} parent=0
    #allocation2 [shape = 'u8[8192]{0}', space=vmem, size = 0x2000, scoped, tag = 'input window, operand 0']
    #allocation3 [shape = 's32[2]{0}', space=sflag, size = 0x8, scoped, tag = 'scoped memory for tpu_custom_call.1']
    #allocation4 [shape = 's32[2]{0}', space=sflag, size = 0x8, scoped, tag = 'scoped memory for tpu_custom_call.1']
    #allocation5 [shape = 'u8[98304]{0}', space=vmem, size = 0x18000, scoped, tag = 'input window, operand 1, single buffered']
    #allocation6 [shape = 's32[1]{0}', space=sflag, size = 0x4, scoped, tag = 'scoped memory for tpu_custom_call.1']
    #allocation7 [shape = 'u8[8192]{0}', space=vmem, size = 0x2000, scoped, tag = 'output window, operand 0']
    #allocation8 [shape = 'u8[8192]{0}', space=vmem, size = 0x2000, scoped, tag = 'output window, operand 1']
    #allocation9 [shape = 's32[2]{0}', space=sflag, size = 0x8, scoped, tag = 'scoped memory for tpu_custom_call.1']
    #allocation10 [shape = 'u8[8192]{0}', space=vmem, size = 0x2000, scoped, tag = 'output window, operand 2']
    %11 = vsyncpa [#allocation3], 0
    %s12 = scalar_lea.sflag [#allocation3], 1
    %13 = vsyncpa %s12, 0
    %14 = vsyncpa [#allocation6], 0
    %15 = vsyncpa [#allocation4], 0
    %s16 = scalar_lea.sflag [#allocation4], 1
    %17 = vsyncpa %s16, 0
    %18 = vsyncpa [#allocation9], 0
    %s19 = scalar_lea.sflag [#allocation9], 1
    %20 = vsyncpa %s19, 0
    loop: start=0, step=1, limit=4
    $region2: #{tpu_custom_call.1} parent=1 // loop_pre_header
      _
    $region3: #{tpu_custom_call.1} parent=1 // loop_header
      %s22 = sphi 0, %s26
      %p23 = scmp.ge.s32.totalorder %s22, 4
      %s32 = sphi 0, %s34
      %s35 = sphi 0, %s32
      %s36 = sphi 0, %s35
      %s52 = sphi 0, %s36
      %s56 = sphi 0, %s56
      %s58 = sphi 0, %s56
      %s59 = sphi 0, %s58
      %s73 = sphi 0, %s59
      %s77 = sphi 0, %s77
      %s79 = sphi 0, %s77
      %s80 = sphi 0, %s79
      %s94 = sphi 0, %s80
      %s100 = sphi 0, %s102
      %s103 = sphi 0, %s100
      %s104 = sphi 0, %s103
      %s120 = sphi 0, %s104
      %s126 = sphi 0, %s128
      %s129 = sphi 0, %s126
      %s130 = sphi 0, %s129
      %s146 = sphi 0, %s130
      %s152 = sphi 0, %s154
      %s155 = sphi 0, %s152
      %s156 = sphi 0, %s155
      %s172 = sphi 0, %s156
    $region4: #{tpu_custom_call.1} parent=1 // loop_header_branch
      %25 = sbr.rel (%p23) target = $region8
    $region5: #{tpu_custom_call.1} parent=1 // loop_body
      %s27 = ssub.s32 %s22, 1
      %s28 = ssub.s32 %s22, 2
      %s29 = sadd.s32 %s22, 1
      %s30 = ssub.s32 %s22, %s29
      %p31 = scmp.eq.s32.totalorder %s30, 0
      %s33 = sadd.s32 %s32, 1
      %s34 = scalar_select %p31, %s32, %s33
      %p37 = pneg %p31
      %p38 = scmp.eq.s32.totalorder %s22, 1
      %p39 = por %p37, %p38
      %p40 = scmp.ne.s32.totalorder %s32, %s35
      %p41 = scmp.eq.s32.totalorder %s22, 0
      %p42 = por %p40, %p41
      %p43 = scmp.ne.s32.totalorder %s32, %s35
      %p44 = scmp.eq.s32.totalorder %s27, 1
      %p45 = por %p43, %p44
      %p46 = scmp.ne.s32.totalorder %s35, %s36
      %p47 = scmp.eq.s32.totalorder %s27, 0
      %p48 = por %p46, %p47
      %p49 = scmp.ne.s32.totalorder %s35, %s36
      %p50 = scmp.eq.s32.totalorder %s28, 1
      %p51 = por %p49, %p50
      %p53 = scmp.ne.s32.totalorder %s36, %s52
      %p54 = scmp.eq.s32.totalorder %s28, 0
      %p55 = por %p53, %p54
      %s57 = sadd.s32 %s56, 1
      %p60 = scmp.eq.s32.totalorder %s22, 1
      %p61 = scmp.ne.s32.totalorder %s56, %s58
      %p62 = scmp.eq.s32.totalorder %s22, 0
      %p63 = por %p61, %p62
      %p64 = scmp.ne.s32.totalorder %s56, %s58
      %p65 = scmp.eq.s32.totalorder %s27, 1
      %p66 = por %p64, %p65
      %p67 = scmp.ne.s32.totalorder %s58, %s59
      %p68 = scmp.eq.s32.totalorder %s27, 0
      %p69 = por %p67, %p68
      %p70 = scmp.ne.s32.totalorder %s58, %s59
      %p71 = scmp.eq.s32.totalorder %s28, 1
      %p72 = por %p70, %p71
      %p74 = scmp.ne.s32.totalorder %s59, %s73
      %p75 = scmp.eq.s32.totalorder %s28, 0
      %p76 = por %p74, %p75
      %s78 = sadd.s32 %s77, 1
      %p81 = scmp.eq.s32.totalorder %s22, 1
      %p82 = scmp.ne.s32.totalorder %s77, %s79
      %p83 = scmp.eq.s32.totalorder %s22, 0
      %p84 = por %p82, %p83
      %p85 = scmp.ne.s32.totalorder %s77, %s79
      %p86 = scmp.eq.s32.totalorder %s27, 1
      %p87 = por %p85, %p86
      %p88 = scmp.ne.s32.totalorder %s79, %s80
      %p89 = scmp.eq.s32.totalorder %s27, 0
      %p90 = por %p88, %p89
      %p91 = scmp.ne.s32.totalorder %s79, %s80
      %p92 = scmp.eq.s32.totalorder %s28, 1
      %p93 = por %p91, %p92
      %p95 = scmp.ne.s32.totalorder %s80, %s94
      %p96 = scmp.eq.s32.totalorder %s28, 0
      %p97 = por %p95, %p96
      %s98 = ssub.s32 %s22, %s29
      %p99 = scmp.eq.s32.totalorder %s98, 0
      %s101 = sadd.s32 %s100, 1
      %s102 = scalar_select %p99, %s100, %s101
      %p105 = pneg %p99
      %p106 = scmp.eq.s32.totalorder %s22, 1
      %p107 = por %p105, %p106
      %p108 = scmp.ne.s32.totalorder %s100, %s103
      %p109 = scmp.eq.s32.totalorder %s22, 0
      %p110 = por %p108, %p109
      %p111 = scmp.ne.s32.totalorder %s100, %s103
      %p112 = scmp.eq.s32.totalorder %s27, 1
      %p113 = por %p111, %p112
      %p114 = scmp.ne.s32.totalorder %s103, %s104
      %p115 = scmp.eq.s32.totalorder %s27, 0
      %p116 = por %p114, %p115
      %p117 = scmp.ne.s32.totalorder %s103, %s104
      %p118 = scmp.eq.s32.totalorder %s28, 1
      %p119 = por %p117, %p118
      %p121 = scmp.ne.s32.totalorder %s104, %s120
      %p122 = scmp.eq.s32.totalorder %s28, 0
      %p123 = por %p121, %p122
      %s124 = ssub.s32 %s22, %s29
      %p125 = scmp.eq.s32.totalorder %s124, 0
      %s127 = sadd.s32 %s126, 1
      %s128 = scalar_select %p125, %s126, %s127
      %p131 = pneg %p125
      %p132 = scmp.eq.s32.totalorder %s22, 1
      %p133 = por %p131, %p132
      %p134 = scmp.ne.s32.totalorder %s126, %s129
      %p135 = scmp.eq.s32.totalorder %s22, 0
      %p136 = por %p134, %p135
      %p137 = scmp.ne.s32.totalorder %s126, %s129
      %p138 = scmp.eq.s32.totalorder %s27, 1
      %p139 = por %p137, %p138
      %p140 = scmp.ne.s32.totalorder %s129, %s130
      %p141 = scmp.eq.s32.totalorder %s27, 0
      %p142 = por %p140, %p141
      %p143 = scmp.ne.s32.totalorder %s129, %s130
      %p144 = scmp.eq.s32.totalorder %s28, 1
      %p145 = por %p143, %p144
      %p147 = scmp.ne.s32.totalorder %s130, %s146
      %p148 = scmp.eq.s32.totalorder %s28, 0
      %p149 = por %p147, %p148
      %s150 = ssub.s32 %s22, %s29
      %p151 = scmp.eq.s32.totalorder %s150, 0
      %s153 = sadd.s32 %s152, 1
      %s154 = scalar_select %p151, %s152, %s153
      %p157 = pneg %p151
      %p158 = scmp.eq.s32.totalorder %s22, 1
      %p159 = por %p157, %p158
      %p160 = scmp.ne.s32.totalorder %s152, %s155
      %p161 = scmp.eq.s32.totalorder %s22, 0
      %p162 = por %p160, %p161
      %p163 = scmp.ne.s32.totalorder %s152, %s155
      %p164 = scmp.eq.s32.totalorder %s27, 1
      %p165 = por %p163, %p164
      %p166 = scmp.ne.s32.totalorder %s155, %s156
      %p167 = scmp.eq.s32.totalorder %s27, 0
      %p168 = por %p166, %p167
      %p169 = scmp.ne.s32.totalorder %s155, %s156
      %p170 = scmp.eq.s32.totalorder %s28, 1
      %p171 = por %p169, %p170
      %p173 = scmp.ne.s32.totalorder %s156, %s172
      %p174 = scmp.eq.s32.totalorder %s28, 0
      %p175 = por %p173, %p174
      %p176 = scmp.le.s32.totalorder 1, %s22
      %p177 = scmp.lt.s32.totalorder %s22, 3
      %p178 = pnand %p176, %p177
      %p179 = pneg %p178
      // Predicated region
      $region9: #{tpu_custom_call.1} parent=5 // pred_check
        _
      $region10: #{tpu_custom_call.1} parent=5 // pred_check_branch
        %181 = sbr.rel (%p178) target = $region12
      $region11: #{tpu_custom_call.1} parent=5 // pred_region
        %s182 = ssub.s32 %s22, 1
        // Predicated region
        $region13: #{tpu_custom_call.1} parent=11 // pred_check
          %p183 = pneg %p69
        $region14: #{tpu_custom_call.1} parent=11 // pred_check_branch
          %185 = sbr.rel (%p183) target = $region16
        $region15: #{tpu_custom_call.1} parent=11 // pred_region
          %s187 = ssub.s32 3072, 3072
          %188 = vsyncadd [#allocation6], %s187
          %s189 = sshll.u32 [#allocation5], 4
          %s190 = int_to_ptr.vmem [resolvable:$true] %s189
          %195 = dma.hbm_to_vmem [thread:$0]  %s1, 3072, %s190, [#allocation6], 192, 192, 12
        $region16: #{tpu_custom_call.1} parent=11 // pred_fallthru
          _
        // Predicated region
        $region17: #{tpu_custom_call.1} parent=11 // pred_check
          %p196 = pneg %p90
        $region18: #{tpu_custom_call.1} parent=11 // pred_check_branch
          %198 = sbr.rel (%p196) target = $region20
        $region19: #{tpu_custom_call.1} parent=11 // pred_region
          _
        $region20: #{tpu_custom_call.1} parent=11 // pred_fallthru
          _
      $region12: #{tpu_custom_call.1} parent=5 // pred_fallthru
        _
      %p199 = scmp.lt.s32.totalorder %s22, 2
      // Predicated region
      $region21: #{tpu_custom_call.1} parent=5 // pred_check
        %p200 = pneg %p199
      $region22: #{tpu_custom_call.1} parent=5 // pred_check_branch
        %202 = sbr.rel (%p200) target = $region24
      $region23: #{tpu_custom_call.1} parent=5 // pred_region
        // Predicated region
        $region25: #{tpu_custom_call.1} parent=23 // pred_check
          %p203 = pneg %p42
        $region26: #{tpu_custom_call.1} parent=23 // pred_check_branch
          %205 = sbr.rel (%p203) target = $region28
        $region27: #{tpu_custom_call.1} parent=23 // pred_region
          %s206 = sand.u32 %s32, 1
          %s207 = scalar_lea.sflag [#allocation3], %s206
          %s208 = sand.u32 %s32, 1
          %s209 = smul.addr %s208, 8
          %s210 = scalar_lea.vmem [#allocation2], %s209
          %s211 = smul.u32 2, %s22
          %s213 = ssub.s32 128, 128
          %214 = vsyncadd %s207, %s213
          %s215 = smul.addr %s211, 64
          %s216 = scalar_lea.hbm %s0, %s215
          %s217 = sshll.u32 %s210, 4
          %s218 = int_to_ptr.vmem [resolvable:$true] %s217
          %223 = dma.hbm_to_vmem [thread:$0]  %s216, 128, %s218, %s207, 64, 64, 4
        $region28: #{tpu_custom_call.1} parent=23 // pred_fallthru
          _
      $region24: #{tpu_custom_call.1} parent=5 // pred_fallthru
        _
      %p224 = scmp.le.s32.totalorder 1, %s22
      %p225 = scmp.lt.s32.totalorder %s22, 3
      %p226 = pnand %p224, %p225
      %p227 = pneg %p226
      // Predicated region
      $region29: #{tpu_custom_call.1} parent=5 // pred_check
        _
      $region30: #{tpu_custom_call.1} parent=5 // pred_check_branch
        %229 = sbr.rel (%p226) target = $region32
      $region31: #{tpu_custom_call.1} parent=5 // pred_region
        %s230 = ssub.s32 %s22, 1
        %s231 = sand.u32 %s35, 1
        %s232 = scalar_lea.sflag [#allocation3], %s231
        %s233 = sand.u32 %s35, 1
        %s234 = smul.addr %s233, 8
        %s235 = scalar_lea.vmem [#allocation2], %s234
        // Predicated region
        $region33: #{tpu_custom_call.1} parent=31 // pred_check
          %p236 = pneg %p48
        $region34: #{tpu_custom_call.1} parent=31 // pred_check_branch
          %238 = sbr.rel (%p236) target = $region36
        $region35: #{tpu_custom_call.1} parent=31 // pred_region
          %239 = dma.done %s232, 128
        $region36: #{tpu_custom_call.1} parent=31 // pred_fallthru
          _
        // Predicated region
        $region37: #{tpu_custom_call.1} parent=31 // pred_check
          %p240 = pneg %p69
        $region38: #{tpu_custom_call.1} parent=31 // pred_check_branch
          %242 = sbr.rel (%p240) target = $region40
        $region39: #{tpu_custom_call.1} parent=31 // pred_region
          %243 = dma.done [#allocation6], 3072
        $region40: #{tpu_custom_call.1} parent=31 // pred_fallthru
          _
        %s244 = sand.u32 %s35, 1
        %s245 = scalar_lea.sflag [#allocation3], %s244
        %s246 = sand.u32 %s35, 1
        %s247 = smul.addr %s246, 8
        %s248 = scalar_lea.vmem [#allocation2], %s247
        %p249 = pneg %p48
        %p250 = pneg %p45
        %p251 = pneg %p69
        %p252 = pneg %p66
        %p253 = pneg %p90
        %p254 = pneg %p87
        %p255 = pneg %p116
        %p256 = pneg %p113
        %s257 = sand.u32 %s103, 1
        %s258 = scalar_lea.sflag [#allocation4], %s257
        %s259 = sand.u32 %s103, 1
        %s260 = smul.addr %s259, 8
        %s261 = scalar_lea.vmem [#allocation7], %s260
        %p262 = pneg %p142
        %p263 = pneg %p139
        %s264 = sand.u32 %s27, 1
        %s265 = scalar_lea.sflag [#allocation9], %s264
        %s266 = sand.u32 %s129, 1
        %s267 = smul.addr %s266, 8
        %s268 = scalar_lea.vmem [#allocation8], %s267
        %p269 = pneg %p168
        %p270 = pneg %p165
        %s271 = sand.u32 %s27, 1
        %s272 = scalar_lea.sflag [#allocation9], %s271
        %s273 = sand.u32 %s155, 1
        %s274 = smul.addr %s273, 8
        %s275 = scalar_lea.vmem [#allocation10], %s274
        %s276 = smul.u32 2, %s27
        %s277 = smul.u32 2, %s27
        %s278 = smul.u32 2, %s27
        %s279 = smul.u32 2, %s27
        %v281 = vld [vmem:[%s235] sm:$0xf]
        %v282 = vld [vmem:[%s235 + $0x4] sm:$0xf]
        %v283 = vld [vmem:[#allocation5] sm:$0xff]
        %v284 = vld [vmem:[#allocation5 + $0x8] sm:$0xf]
        %v285 = vld [vmem:[#allocation5 + $0xc] sm:$0xff]
        %v286 = vld [vmem:[#allocation5 + $0x14] sm:$0xf]
        %v287 = vld [vmem:[#allocation5 + $0x18] sm:$0xff]
        %v288 = vld [vmem:[#allocation5 + $0x20] sm:$0xf]
        %v289 = vld [vmem:[#allocation5 + $0x24] sm:$0xff]
        %v290 = vld [vmem:[#allocation5 + $0x2c] sm:$0xf]
        %v291 = vld [vmem:[#allocation5 + $0x30] sm:$0xff]
        %v292 = vld [vmem:[#allocation5 + $0x38] sm:$0xf]
        %v293 = vld [vmem:[#allocation5 + $0x3c] sm:$0xff]
        %v294 = vld [vmem:[#allocation5 + $0x44] sm:$0xf]
        %v295 = vld [vmem:[#allocation5 + $0x48] sm:$0xff]
        %v296 = vld [vmem:[#allocation5 + $0x50] sm:$0xf]
        %v297 = vld [vmem:[#allocation5 + $0x54] sm:$0xff]
        %v298 = vld [vmem:[#allocation5 + $0x5c] sm:$0xf]
        %v299 = vld [vmem:[#allocation5 + $0x60] sm:$0xff]
        %v300 = vld [vmem:[#allocation5 + $0x68] sm:$0xf]
        %v301 = vld [vmem:[#allocation5 + $0x6c] sm:$0xff]
        %v302 = vld [vmem:[#allocation5 + $0x74] sm:$0xf]
        %v303 = vld [vmem:[#allocation5 + $0x78] sm:$0xff]
        %v304 = vld [vmem:[#allocation5 + $0x80] sm:$0xf]
        %v305 = vld [vmem:[#allocation5 + $0x84] sm:$0xff]
        %v306 = vld [vmem:[#allocation5 + $0x8c] sm:$0xf]
        %v307 = vld [vmem:[#allocation5 + $0x90] sm:$0xff]
        %v308 = vld [vmem:[#allocation5 + $0x98] sm:$0xf]
        %v309 = vld [vmem:[#allocation5 + $0x9c] sm:$0xff]
        %v310 = vld [vmem:[#allocation5 + $0xa4] sm:$0xf]
        %v311 = vld [vmem:[#allocation5 + $0xa8] sm:$0xff]
        %v312 = vld [vmem:[#allocation5 + $0xb0] sm:$0xf]
        %v313 = vld [vmem:[#allocation5 + $0xb4] sm:$0xff]
        %v314 = vld [vmem:[#allocation5 + $0xbc] sm:$0xf]
        %v315 = vld [vmem:[%s2] sm:$0x7]
        %v317 = vlaneseq
        %v318 = vshrl.u32 %v317, 7
        %v319 = vsub.s32 0, %v318
        %v320 = vrot.slane %v315, %v319
        %v321 = vlaneseq
        %v322 = vshrl.u32 %v321, 7
        %v323 = vsub.s32 1, %v322
        %v324 = vrot.slane %v315, %v323
        %v325 = vlaneseq
        %v326 = vshrl.u32 %v325, 7
        %v327 = vsub.s32 2, %v326
        %v328 = vrot.slane %v315, %v327
        %v334 = vunpack.c.l.b16 %v281
        %v335 = vunpack.c.l.b16 %v282
        %v336 = vpack.c.b16 %v335, %v334
        %v370 = vunpack.c.l.b16 %v283
        %v371 = vunpack.c.h.b16 %v283
        %v372 = vunpack.c.l.b16 %v284
        %v373 = vunpack.c.l.b16 %v285
        %v374 = vunpack.c.h.b16 %v285
        %v375 = vunpack.c.l.b16 %v286
        %v376 = vunpack.c.l.b16 %v287
        %v377 = vunpack.c.h.b16 %v287
        %v378 = vunpack.c.l.b16 %v288
        %v379 = vunpack.c.l.b16 %v289
        %v380 = vunpack.c.h.b16 %v289
        %v381 = vunpack.c.l.b16 %v290
        %v382 = vunpack.c.l.b16 %v291
        %v383 = vunpack.c.h.b16 %v291
        %v384 = vunpack.c.l.b16 %v292
        %v385 = vunpack.c.l.b16 %v293
        %v386 = vunpack.c.h.b16 %v293
        %v387 = vunpack.c.l.b16 %v294
        %v388 = vunpack.c.l.b16 %v295
        %v389 = vunpack.c.h.b16 %v295
        %v390 = vunpack.c.l.b16 %v296
        %v391 = vunpack.c.l.b16 %v297
        %v392 = vunpack.c.h.b16 %v297
        %v393 = vunpack.c.l.b16 %v298
        %v394 = vunpack.c.l.b16 %v299
        %v395 = vunpack.c.h.b16 %v299
        %v396 = vunpack.c.l.b16 %v300
        %v397 = vunpack.c.l.b16 %v301
        %v398 = vunpack.c.h.b16 %v301
        %v399 = vunpack.c.l.b16 %v302
        %v400 = vunpack.c.l.b16 %v303
        %v401 = vunpack.c.h.b16 %v303
        %v402 = vunpack.c.l.b16 %v304
        %v403 = vunpack.c.l.b16 %v305
        %v404 = vunpack.c.h.b16 %v305
        %v405 = vunpack.c.l.b16 %v306
        %v406 = vunpack.c.l.b16 %v307
        %v407 = vunpack.c.h.b16 %v307
        %v408 = vunpack.c.l.b16 %v308
        %v409 = vunpack.c.l.b16 %v309
        %v410 = vunpack.c.h.b16 %v309
        %v411 = vunpack.c.l.b16 %v310
        %v412 = vunpack.c.l.b16 %v311
        %v413 = vunpack.c.h.b16 %v311
        %v414 = vunpack.c.l.b16 %v312
        %v415 = vunpack.c.l.b16 %v313
        %v416 = vunpack.c.h.b16 %v313
        %v417 = vunpack.c.l.b16 %v314
        %v418 = vpack.c.b16 %v373, %v370
        %v419 = vpack.c.b16 %v374, %v371
        %v420 = vpack.c.b16 %v375, %v372
        %v421 = vpack.c.b16 %v379, %v376
        %v422 = vpack.c.b16 %v380, %v377
        %v423 = vpack.c.b16 %v381, %v378
        %v424 = vpack.c.b16 %v385, %v382
        %v425 = vpack.c.b16 %v386, %v383
        %v426 = vpack.c.b16 %v387, %v384
        %v427 = vpack.c.b16 %v391, %v388
        %v428 = vpack.c.b16 %v392, %v389
        %v429 = vpack.c.b16 %v393, %v390
        %v430 = vpack.c.b16 %v397, %v394
        %v431 = vpack.c.b16 %v398, %v395
        %v432 = vpack.c.b16 %v399, %v396
        %v433 = vpack.c.b16 %v403, %v400
        %v434 = vpack.c.b16 %v404, %v401
        %v435 = vpack.c.b16 %v405, %v402
        %v436 = vpack.c.b16 %v409, %v406
        %v437 = vpack.c.b16 %v410, %v407
        %v438 = vpack.c.b16 %v411, %v408
        %v439 = vpack.c.b16 %v415, %v412
        %v440 = vpack.c.b16 %v416, %v413
        %v441 = vpack.c.b16 %v417, %v414
        %466 = vmatprep.subr.bf16.mxu0 %v440
        %467 = vmatpush1.bf16.msra.mxu0 %v439
        %468 = vmatprep.subr.bf16.mxu0 %v437
        %469 = vmatpush1.bf16.msra.mxu0 %v436
        %470 = vmatprep.subr.bf16.mxu0 %v434
        %471 = vmatpush1.bf16.msra.mxu0 %v433
        %472 = vmatprep.subr.bf16.mxu0 %v431
        %473 = vmatpush1.bf16.msra.mxu0 %v430
        %474 = vmatprep.subr.bf16.mxu0 %v428
        %475 = vmatpush1.bf16.msra.mxu0 %v427
        %476 = vmatprep.subr.bf16.mxu0 %v425
        %477 = vmatpush1.bf16.msra.mxu0 %v424
        %478 = vmatprep.subr.bf16.mxu0 %v422
        %479 = vmatpush1.bf16.msra.mxu0 %v421
        %480 = vmatprep.subr.bf16.mxu0 %v419
        %481 = vmatpush1.bf16.msra.mxu0 %v418
        %482 = vmatprep.subr.bf16.mxu0 0
        %483 = vmatpush2.bf16.msra.mxu0 0
        %484 = vmatprep.subr.bf16.mxu0 0
        %485 = vmatpush2.bf16.msra.mxu0 0
        %486 = vmatprep.subr.bf16.mxu0 0
        %487 = vmatpush2.bf16.msra.mxu0 0
        %488 = vmatprep.subr.bf16.mxu0 0
        %489 = vmatpush2.bf16.msra.mxu0 0
        %490 = vmatprep.subr.bf16.mxu0 0
        %491 = vmatpush2.bf16.msra.mxu0 0
        %492 = vmatprep.subr.bf16.mxu0 0
        %493 = vmatpush2.bf16.msra.mxu0 0
        %494 = vmatprep.subr.bf16.mxu0 0
        %495 = vmatpush2.bf16.msra.mxu0 0
        %496 = vmatprep.subr.bf16.mxu0 0
        %497 = vmatpush2.bf16.msra.mxu0 0
        %498 = vmatprep.mubr.bf16.mxu0 0
        %499 = vmatmul.mubr.bf16.gmra.mxu0 %v336
        %v500 = vpop.f32.mrf.mxu0
        %v501 = vadd.f32 %v320, %v500
        %v502 = vpop.f32.mrf.mxu0
        %v503 = vadd.f32 %v324, %v502
        %v504 = vpop.f32.mrf.mxu0
        %v505 = vadd.f32 %v320, %v504
        %v506 = vpop.f32.mrf.mxu0
        %v507 = vadd.f32 %v324, %v506
        %508 = vdwg.mxu0
        %509 = vmatprep.subr.bf16.mxu0 0
        %510 = vmatpush1.bf16.msra.mxu0 %v441
        %511 = vmatprep.subr.bf16.mxu0 0
        %512 = vmatpush1.bf16.msra.mxu0 %v438
        %513 = vmatprep.subr.bf16.mxu0 0
        %514 = vmatpush1.bf16.msra.mxu0 %v435
        %515 = vmatprep.subr.bf16.mxu0 0
        %516 = vmatpush1.bf16.msra.mxu0 %v432
        %517 = vmatprep.subr.bf16.mxu0 0
        %518 = vmatpush1.bf16.msra.mxu0 %v429
        %519 = vmatprep.subr.bf16.mxu0 0
        %520 = vmatpush1.bf16.msra.mxu0 %v426
        %521 = vmatprep.subr.bf16.mxu0 0
        %522 = vmatpush1.bf16.msra.mxu0 %v423
        %523 = vmatprep.subr.bf16.mxu0 0
        %524 = vmatpush1.bf16.msra.mxu0 %v420
        %525 = vmatprep.subr.bf16.mxu0 0
        %526 = vmatpush2.bf16.msra.mxu0 0
        %527 = vmatprep.subr.bf16.mxu0 0
        %528 = vmatpush2.bf16.msra.mxu0 0
        %529 = vmatprep.subr.bf16.mxu0 0
        %530 = vmatpush2.bf16.msra.mxu0 0
        %531 = vmatprep.subr.bf16.mxu0 0
        %532 = vmatpush2.bf16.msra.mxu0 0
        %533 = vmatprep.subr.bf16.mxu0 0
        %534 = vmatpush2.bf16.msra.mxu0 0
        %535 = vmatprep.subr.bf16.mxu0 0
        %536 = vmatpush2.bf16.msra.mxu0 0
        %537 = vmatprep.subr.bf16.mxu0 0
        %538 = vmatpush2.bf16.msra.mxu0 0
        %539 = vmatprep.subr.bf16.mxu0 0
        %540 = vmatpush2.bf16.msra.mxu0 0
        %541 = vmatprep.mubr.bf16.mxu0 0
        %542 = vmatmul.mubr.bf16.gmra.mxu0 %v336
        %v543 = vpop.f32.mrf.mxu0
        %v544 = vadd.f32 %v328, %v543
        %v545 = vpop.f32.mrf.mxu0
        %v546 = vpop.f32.mrf.mxu0
        %v547 = vadd.f32 %v328, %v546
        %v548 = vpop.f32.mrf.mxu0
        %549 = vdwg.mxu0
        %v550 = vpack.c.bf16 %v505, %v501
        %v552 = vunpack.c.l.b16 %v550
        %v553 = vunpack.c.h.b16 %v550
        %v554 = vpack.c.b16 %v552, %v552
        %v555 = vpack.c.b16 %v553, %v553
        %558 = vst [vmem:[%s261] sm:$0xf] %v554
        %559 = vst [vmem:[%s261 + $0x4] sm:$0xf] %v555
        %v560 = vpack.c.bf16 %v507, %v503
        %v562 = vunpack.c.l.b16 %v560
        %v563 = vunpack.c.h.b16 %v560
        %v564 = vpack.c.b16 %v562, %v562
        %v565 = vpack.c.b16 %v563, %v563
        %568 = vst [vmem:[%s268] sm:$0xf] %v564
        %569 = vst [vmem:[%s268 + $0x4] sm:$0xf] %v565
        %v570 = vpack.c.bf16 %v547, %v544
        %v572 = vunpack.c.l.b16 %v570
        %v573 = vunpack.c.h.b16 %v570
        %v574 = vpack.c.b16 %v572, %v572
        %v575 = vpack.c.b16 %v573, %v573
        %578 = vst [vmem:[%s275] sm:$0xf] %v574
        %579 = vst [vmem:[%s275 + $0x4] sm:$0xf] %v575
        %s580 = sand.u32 %s103, 1
        %s581 = scalar_lea.sflag [#allocation4], %s580
        %s582 = sand.u32 %s103, 1
        %s583 = smul.addr %s582, 8
        %s584 = scalar_lea.vmem [#allocation7], %s583
        %s585 = sand.u32 %s27, 1
        %s586 = scalar_lea.sflag [#allocation9], %s585
        %s587 = sand.u32 %s129, 1
        %s588 = smul.addr %s587, 8
        %s589 = scalar_lea.vmem [#allocation8], %s588
        %s590 = sand.u32 %s27, 1
        %s591 = scalar_lea.sflag [#allocation9], %s590
        %s592 = sand.u32 %s155, 1
        %s593 = smul.addr %s592, 8
        %s594 = scalar_lea.vmem [#allocation10], %s593
        // Predicated region
        $region41: #{tpu_custom_call.1} parent=31 // pred_check
          %p595 = pneg %p113
        $region42: #{tpu_custom_call.1} parent=31 // pred_check_branch
          %597 = sbr.rel (%p595) target = $region44
        $region43: #{tpu_custom_call.1} parent=31 // pred_region
          %s598 = smul.u32 2, %s27
          %s600 = ssub.s32 128, 128
          %601 = vsyncadd %s581, %s600
          %s602 = smul.addr %s598, 64
          %s603 = scalar_lea.hbm %s3, %s602
          %s604 = sshll.u32 %s584, 4
          %s605 = int_to_ptr.vmem [resolvable:$true] %s604
          %610 = dma.vmem_to_hbm [thread:$0]  %s605, 128, %s603, %s581, 64, 64, 4
        $region44: #{tpu_custom_call.1} parent=31 // pred_fallthru
          _
        // Predicated region
        $region45: #{tpu_custom_call.1} parent=31 // pred_check
          %p611 = pneg %p139
        $region46: #{tpu_custom_call.1} parent=31 // pred_check_branch
          %613 = sbr.rel (%p611) target = $region48
        $region47: #{tpu_custom_call.1} parent=31 // pred_region
          %s614 = smul.u32 2, %s27
          %s616 = ssub.s32 128, 128
          %617 = vsyncadd %s586, %s616
          %s618 = smul.addr %s614, 64
          %s619 = scalar_lea.hbm %s4, %s618
          %s620 = sshll.u32 %s589, 4
          %s621 = int_to_ptr.vmem [resolvable:$true] %s620
          %626 = dma.vmem_to_hbm [thread:$0]  %s621, 128, %s619, %s586, 64, 64, 4
        $region48: #{tpu_custom_call.1} parent=31 // pred_fallthru
          _
        // Predicated region
        $region49: #{tpu_custom_call.1} parent=31 // pred_check
          %p627 = pneg %p165
        $region50: #{tpu_custom_call.1} parent=31 // pred_check_branch
          %629 = sbr.rel (%p627) target = $region52
        $region51: #{tpu_custom_call.1} parent=31 // pred_region
          %s630 = smul.u32 2, %s27
          %s632 = ssub.s32 128, 128
          %633 = vsyncadd %s591, %s632
          %s634 = smul.addr %s630, 64
          %s635 = scalar_lea.hbm %s5, %s634
          %s636 = sshll.u32 %s594, 4
          %s637 = int_to_ptr.vmem [resolvable:$true] %s636
          %642 = dma.vmem_to_hbm [thread:$0]  %s637, 128, %s635, %s591, 64, 64, 4
        $region52: #{tpu_custom_call.1} parent=31 // pred_fallthru
          _
      $region32: #{tpu_custom_call.1} parent=5 // pred_fallthru
        _
      %p643 = scmp.le.s32.totalorder 2, %s22
      // Predicated region
      $region53: #{tpu_custom_call.1} parent=5 // pred_check
        %p644 = pneg %p643
      $region54: #{tpu_custom_call.1} parent=5 // pred_check_branch
        %646 = sbr.rel (%p644) target = $region56
      $region55: #{tpu_custom_call.1} parent=5 // pred_region
        %s647 = ssub.s32 %s22, 2
        // Predicated region
        $region57: #{tpu_custom_call.1} parent=55 // pred_check
          %p648 = pneg %p119
        $region58: #{tpu_custom_call.1} parent=55 // pred_check_branch
          %650 = sbr.rel (%p648) target = $region60
        $region59: #{tpu_custom_call.1} parent=55 // pred_region
          %s651 = sand.u32 %s104, 1
          %s652 = scalar_lea.sflag [#allocation4], %s651
          %s653 = sand.u32 %s104, 1
          %s654 = smul.addr %s653, 8
          %s655 = scalar_lea.vmem [#allocation7], %s654
          %656 = dma.done %s652, 128
        $region60: #{tpu_custom_call.1} parent=55 // pred_fallthru
          _
        // Predicated region
        $region61: #{tpu_custom_call.1} parent=55 // pred_check
          %p657 = pneg %p145
        $region62: #{tpu_custom_call.1} parent=55 // pred_check_branch
          %659 = sbr.rel (%p657) target = $region64
        $region63: #{tpu_custom_call.1} parent=55 // pred_region
          %s660 = sand.u32 %s28, 1
          %s661 = scalar_lea.sflag [#allocation9], %s660
          %s662 = sand.u32 %s130, 1
          %s663 = smul.addr %s662, 8
          %s664 = scalar_lea.vmem [#allocation8], %s663
          %665 = dma.done %s661, 128
        $region64: #{tpu_custom_call.1} parent=55 // pred_fallthru
          _
        // Predicated region
        $region65: #{tpu_custom_call.1} parent=55 // pred_check
          %p666 = pneg %p171
        $region66: #{tpu_custom_call.1} parent=55 // pred_check_branch
          %668 = sbr.rel (%p666) target = $region68
        $region67: #{tpu_custom_call.1} parent=55 // pred_region
          %s669 = sand.u32 %s28, 1
          %s670 = scalar_lea.sflag [#allocation9], %s669
          %s671 = sand.u32 %s156, 1
          %s672 = smul.addr %s671, 8
          %s673 = scalar_lea.vmem [#allocation10], %s672
          %674 = dma.done %s670, 128
        $region68: #{tpu_custom_call.1} parent=55 // pred_fallthru
          _
      $region56: #{tpu_custom_call.1} parent=5 // pred_fallthru
        _
    $region6: #{tpu_custom_call.1} parent=1 // loop_footer
      %s26 = sadd.s32 1, %s22
    $region7: #{tpu_custom_call.1} parent=1 // loop_footer_branch
      %21 = sbr.rel target = $region3
    $region8: #{tpu_custom_call.1} parent=1 // loop_exit
      _
    %675 = vsyncpa [#allocation3], 1
    %s676 = scalar_lea.sflag [#allocation3], 1
    %677 = vsyncpa %s676, 1
    %678 = vsyncpa [#allocation6], 1
    %679 = vsyncpa [#allocation4], 1
    %s680 = scalar_lea.sflag [#allocation4], 1
    %681 = vsyncpa %s680, 1
    %682 = vsyncpa [#allocation9], 1
    %s683 = scalar_lea.sflag [#allocation9], 1
    %684 = vsyncpa %s683, 1

</llo_original>
